<compile_context>
chip_gen: v5e
topology: v5e:2x2
jax: 0.10.0
libtpu: 0.0.40
codegen_flags: <defaults>
</compile_context>

<pallas_src>
import jax
import jax.numpy as jnp
from jax.experimental import pallas as pl
from jax.experimental.pallas import tpu as pltpu


def _round_up(x, m):
    return ((x + m - 1) // m) * m


def mlp_softmax_kernel(x_ref, w1_ref, b1_ref, w2_ref, b2_ref, o_ref, acc_ref):
    k = pl.program_id(1)

    # ---- init accumulator on the first K tile ----
    @pl.when(k == 0)
    def _():
        acc_ref[...] = jnp.zeros_like(acc_ref)

    # ---- partial Linear(V, 100): bf16 MXU matmul, f32 accumulation ----
    acc_ref[...] += jnp.dot(
        x_ref[...], w1_ref[...], preferred_element_type=jnp.float32
    )

    # ---- finalize on the last K tile ----
    @pl.when(k == pl.num_programs(1) - 1)
    def _():
        # bias + ReLU in f32 (VPU); Dropout(p=0.5) is identity in eval mode.
        h = jnp.maximum(acc_ref[...] + b1_ref[...], 0.0)

        # Linear(100, C_padded): pad columns of w2 are zero, pad bias lanes are -1e30,
        # so the padded softmax is exact on the real class lanes.
        logits = jnp.dot(h, w2_ref[...], preferred_element_type=jnp.float32)
        logits = logits + b2_ref[...]

        # stable softmax over the (padded) class lanes
        m = jnp.max(logits, axis=-1, keepdims=True)
        e = jnp.exp(logits - m)
        denom = jnp.sum(e, axis=-1, keepdims=True)
        o_ref[...] = (e / denom).astype(o_ref.dtype)


def mlp_forward(x, w1, b1, w2, b2, *, tb=256, tk=2048):
    """x: [B, V] f32, w1: [V, H], b1: [H] or [1, H], w2: [H, C], b2: [C] or [1, C]."""
    B, V = x.shape
    H = w1.shape[1]
    C = w2.shape[1]
    CP = max(128, _round_up(C, 128))  # lane-dense padded class dim

    # Tile sizes: respect (8, 128) tiling and never exceed the (padded) problem size.
    tb = min(tb, _round_up(B, 8))
    tk = min(tk, _round_up(V, 128))
    Bp = _round_up(B, tb)
    Vp = _round_up(V, tk)

    # bf16 MXU inputs for the dominant x / w1 streams (zero-padding is exact for the dot).
    xb = jnp.pad(x.astype(jnp.bfloat16), ((0, Bp - B), (0, Vp - V)))
    w1b = jnp.pad(w1.astype(jnp.bfloat16), ((0, Vp - V), (0, 0)))
    b1f = b1.reshape(1, H).astype(jnp.float32)
    # Second linear padded to a lane-dense class slab; pad bias lanes -> -1e30 so
    # softmax assigns them ~0 probability.
    w2p = jnp.pad(w2.astype(jnp.float32), ((0, 0), (0, CP - C)))
    b2p = jnp.pad(
        b2.reshape(1, C).astype(jnp.float32), ((0, 0), (0, CP - C)),
        constant_values=-1e30,
    )

    grid = (Bp // tb, Vp // tk)

    out = pl.pallas_call(
        mlp_softmax_kernel,
        out_shape=jax.ShapeDtypeStruct((Bp, CP), jnp.float32),
        grid_spec=pltpu.PrefetchScalarGridSpec(
            num_scalar_prefetch=0,
            grid=grid,
            in_specs=[
                pl.BlockSpec((tb, tk), lambda i, k: (i, k)),   # x tile
                pl.BlockSpec((tk, H), lambda i, k: (k, 0)),    # w1 tile
                pl.BlockSpec((1, H), lambda i, k: (0, 0)),     # b1
                pl.BlockSpec((H, CP), lambda i, k: (0, 0)),    # w2 (padded)
                pl.BlockSpec((1, CP), lambda i, k: (0, 0)),    # b2 (padded)
            ],
            # Same output block across K -> resident accumulator-style output.
            out_specs=pl.BlockSpec((tb, CP), lambda i, k: (i, 0)),
            scratch_shapes=[pltpu.VMEM((tb, H), jnp.float32)],
        ),
        compiler_params=pltpu.CompilerParams(
            dimension_semantics=("parallel", "arbitrary"),
            vmem_limit_bytes=48 * 1024 * 1024,  # headroom under v7x 64 MiB physical VMEM
        ),
    )(xb, w1b, b1f, w2p, b2p)

    return out[:B, :C]


def reference_forward(x, w1, b1, w2, b2):
    # Match the kernel's bf16 MXU inputs for a tight numeric comparison.
    xb = x.astype(jnp.bfloat16).astype(jnp.float32)
    w1b = w1.astype(jnp.bfloat16).astype(jnp.float32)
    h = jnp.maximum(xb @ w1b + b1.reshape(1, -1), 0.0)
    logits = h @ w2 + b2.reshape(1, -1)
    return jax.nn.softmax(logits, axis=-1)


if __name__ == "__main__":
    # Small, deliberately non-aligned shapes to exercise padding + multi-step grid.
    B = 10      # batch of reviews (pads to 16)
    V = 300     # vocabulary size (len(voca)); pads to 384 -> 3 K-tiles at tk=128
    H = 100     # hidden units
    C = 2       # output classes (pos / neg)

    key = jax.random.PRNGKey(0)
    kx, kw1, kb1, kw2, kb2 = jax.random.split(key, 5)

    x = jax.random.normal(kx, (B, V), dtype=jnp.float32)
    lim1 = 1.0 / jnp.sqrt(V)
    w1 = jax.random.uniform(kw1, (V, H), minval=-lim1, maxval=lim1, dtype=jnp.float32)
    b1 = jax.random.uniform(kb1, (1, H), minval=-lim1, maxval=lim1, dtype=jnp.float32)
    lim2 = 1.0 / jnp.sqrt(H)
    w2 = jax.random.uniform(kw2, (H, C), minval=-lim2, maxval=lim2, dtype=jnp.float32)
    b2 = jax.random.uniform(kb2, (1, C), minval=-lim2, maxval=lim2, dtype=jnp.float32)

    # Small tiles in the demo so the grid is (2, 3) and the accumulator path is exercised.
    out = mlp_forward(x, w1, b1, w2, b2, tb=8, tk=128)
    out = jax.block_until_ready(out)

    ref = reference_forward(x, w1, b1, w2, b2)
    assert out.shape == (B, C)
    assert jnp.allclose(out, ref, atol=1e-3, rtol=1e-3), "mismatch vs reference"
    assert jnp.allclose(jnp.sum(out, axis=-1), 1.0, atol=1e-5), "softmax rows must sum to 1"

    print("KERNEL_OK")
</pallas_src>

<mosaic_0001>
module attributes {stable_mosaic.version = 11 : i64} {
  func.func @mlp_softmax_kernel(%arg0: i32, %arg1: i32, %arg2: memref<8x128xbf16, #tpu.memory_space<vmem>>, %arg3: memref<128x100xbf16, #tpu.memory_space<vmem>>, %arg4: memref<1x100xf32, #tpu.memory_space<vmem>>, %arg5: memref<100x128xf32, #tpu.memory_space<vmem>>, %arg6: memref<1x128xf32, #tpu.memory_space<vmem>>, %arg7: memref<8x128xf32, #tpu.memory_space<vmem>>, %arg8: memref<8x100xf32, #tpu.memory_space<vmem>>) attributes {dimension_semantics = [#tpu.dimension_semantics<parallel>, #tpu.dimension_semantics<arbitrary>], iteration_bounds = array<i64: 2, 3>, scalar_prefetch = 0 : i64, scratch_operands = 1 : i64, tpu.core_type = #tpu.core_type<tc>, window_params = [{transform_indices = @transform_0, window_bounds = array<i64: 8, 128>}, {transform_indices = @transform_1, window_bounds = array<i64: 128, 100>}, {pipeline_mode = #tpu.pipeline_mode<synchronous>, transform_indices = @transform_2, window_bounds = array<i64: 1, 100>}, {pipeline_mode = #tpu.pipeline_mode<synchronous>, transform_indices = @transform_3, window_bounds = array<i64: 100, 128>}, {pipeline_mode = #tpu.pipeline_mode<synchronous>, transform_indices = @transform_4, window_bounds = array<i64: 1, 128>}, {transform_indices = @transform_5, window_bounds = array<i64: 8, 128>}]} {
    %c0_i32 = arith.constant 0 : i32
    %0 = arith.cmpi eq, %arg1, %c0_i32 : i32
    %1 = arith.extui %0 : i1 to i32
    %c0_i32_0 = arith.constant 0 : i32
    %2 = arith.cmpi ne, %1, %c0_i32_0 : i32
    scf.if %2 {
      %cst_9 = arith.constant 0.000000e+00 : f32
      %12 = vector.broadcast %cst_9 : f32 to vector<8x100xf32>
      %c0_10 = arith.constant 0 : index
      %c0_11 = arith.constant 0 : index
      %13 = vector.load %arg8[%c0_10, %c0_11] : memref<8x100xf32, #tpu.memory_space<vmem>>, vector<8x100xf32>
      tpu.vector_store %arg8[%c0_10, %c0_11], %12 {strides = array<i32>} : memref<8x100xf32, #tpu.memory_space<vmem>>, vector<8x100xf32>,
    } else {
    }
    %c0 = arith.constant 0 : index
    %c0_1 = arith.constant 0 : index
    %3 = vector.load %arg8[%c0, %c0_1] : memref<8x100xf32, #tpu.memory_space<vmem>>, vector<8x100xf32>
    %c0_2 = arith.constant 0 : index
    %c0_3 = arith.constant 0 : index
    %4 = vector.load %arg2[%c0_2, %c0_3] : memref<8x128xbf16, #tpu.memory_space<vmem>>, vector<8x128xbf16>
    %c0_4 = arith.constant 0 : index
    %c0_5 = arith.constant 0 : index
    %5 = vector.load %arg3[%c0_4, %c0_5] : memref<128x100xbf16, #tpu.memory_space<vmem>>, vector<128x100xbf16>
    %cst = arith.constant dense<0.000000e+00> : vector<8x100xf32>
    %6 = tpu.matmul %4, %5, %cst {dimension_numbers = #tpu.dot_dimension_numbers<[1], [0], [0], [1], [0, 0, 1, 1], [], []>} : vector<8x128xbf16>, vector<128x100xbf16>, vector<8x100xf32> -> vector<8x100xf32>
    %7 = arith.addf %3, %6 : vector<8x100xf32>
    %c0_6 = arith.constant 0 : index
    %c0_7 = arith.constant 0 : index
    %8 = vector.load %arg8[%c0_6, %c0_7] : memref<8x100xf32, #tpu.memory_space<vmem>>, vector<8x100xf32>
    tpu.vector_store %arg8[%c0_6, %c0_7], %7 {strides = array<i32>} : memref<8x100xf32, #tpu.memory_space<vmem>>, vector<8x100xf32>,
    %c2_i32 = arith.constant 2 : i32
    %9 = arith.cmpi eq, %arg1, %c2_i32 : i32
    %10 = arith.extui %9 : i1 to i32
    %c0_i32_8 = arith.constant 0 : i32
    %11 = arith.cmpi ne, %10, %c0_i32_8 : i32
    scf.if %11 {
      %c0_9 = arith.constant 0 : index
      %c0_10 = arith.constant 0 : index
      %12 = vector.load %arg8[%c0_9, %c0_10] : memref<8x100xf32, #tpu.memory_space<vmem>>, vector<8x100xf32>
      %c0_11 = arith.constant 0 : index
      %c0_12 = arith.constant 0 : index
      %13 = vector.load %arg4[%c0_11, %c0_12] : memref<1x100xf32, #tpu.memory_space<vmem>>, vector<1x100xf32>
      %14 = vector.broadcast %13 : vector<1x100xf32> to vector<8x100xf32>
      %15 = arith.addf %12, %14 : vector<8x100xf32>
      %cst_13 = arith.constant 0.000000e+00 : f32
      %16 = vector.broadcast %cst_13 : f32 to vector<8x100xf32>
      %17 = arith.maximumf %15, %16 : vector<8x100xf32>
      %c0_14 = arith.constant 0 : index
      %c0_15 = arith.constant 0 : index
      %18 = vector.load %arg5[%c0_14, %c0_15] : memref<100x128xf32, #tpu.memory_space<vmem>>, vector<100x128xf32>
      %cst_16 = arith.constant dense<0.000000e+00> : vector<8x128xf32>
      %19 = tpu.matmul %17, %18, %cst_16 {dimension_numbers = #tpu.dot_dimension_numbers<[1], [0], [0], [1], [0, 0, 1, 1], [], []>} : vector<8x100xf32>, vector<100x128xf32>, vector<8x128xf32> -> vector<8x128xf32>
      %c0_17 = arith.constant 0 : index
      %c0_18 = arith.constant 0 : index
      %20 = vector.load %arg6[%c0_17, %c0_18] : memref<1x128xf32, #tpu.memory_space<vmem>>, vector<1x128xf32>
      %21 = vector.broadcast %20 : vector<1x128xf32> to vector<8x128xf32>
      %22 = arith.addf %19, %21 : vector<8x128xf32>
      %cst_19 = arith.constant dense<0xFF800000> : vector<8xf32>
      %23 = vector.multi_reduction <maximumf>, %22, %cst_19 [1] : vector<8x128xf32> to vector<8xf32>
      %24 = vector.shape_cast %23 : vector<8xf32> to vector<8x1xf32>
      %25 = vector.broadcast %24 : vector<8x1xf32> to vector<8x128xf32>
      %26 = arith.subf %22, %25 : vector<8x128xf32>
      %27 = math.exp %26 : vector<8x128xf32>
      %cst_20 = arith.constant dense<0.000000e+00> : vector<8xf32>
      %28 = vector.multi_reduction <add>, %27, %cst_20 [1] : vector<8x128xf32> to vector<8xf32>
      %29 = vector.shape_cast %28 : vector<8xf32> to vector<8x1xf32>
      %30 = vector.broadcast %29 : vector<8x1xf32> to vector<8x128xf32>
      %31 = arith.divf %27, %30 : vector<8x128xf32>
      %c0_21 = arith.constant 0 : index
      %c0_22 = arith.constant 0 : index
      %32 = vector.load %arg7[%c0_21, %c0_22] : memref<8x128xf32, #tpu.memory_space<vmem>>, vector<8x128xf32>
      tpu.vector_store %arg7[%c0_21, %c0_22], %31 {strides = array<i32>} : memref<8x128xf32, #tpu.memory_space<vmem>>, vector<8x128xf32>,
    } else {
    }
    return
  }
  func.func @transform_0(%arg0: i32, %arg1: i32) -> (i32, i32) {
    %c0_i32 = arith.constant 0 : i32
    return %arg0, %arg1 : i32, i32
  }
  func.func @transform_1(%arg0: i32, %arg1: i32) -> (i32, i32) {
    %c0_i32 = arith.constant 0 : i32
    %c0_i32_0 = arith.constant 0 : i32
    return %arg1, %c0_i32 : i32, i32
  }
  func.func @transform_2(%arg0: i32, %arg1: i32) -> (i32, i32) {
    %c0_i32 = arith.constant 0 : i32
    %c0_i32_0 = arith.constant 0 : i32
    %c0_i32_1 = arith.constant 0 : i32
    return %c0_i32, %c0_i32_0 : i32, i32
  }
  func.func @transform_3(%arg0: i32, %arg1: i32) -> (i32, i32) {
    %c0_i32 = arith.constant 0 : i32
    %c0_i32_0 = arith.constant 0 : i32
    %c0_i32_1 = arith.constant 0 : i32
    return %c0_i32, %c0_i32_0 : i32, i32
  }
  func.func @transform_4(%arg0: i32, %arg1: i32) -> (i32, i32) {
    %c0_i32 = arith.constant 0 : i32
    %c0_i32_0 = arith.constant 0 : i32
    %c0_i32_1 = arith.constant 0 : i32
    return %c0_i32, %c0_i32_0 : i32, i32
  }
  func.func @transform_5(%arg0: i32, %arg1: i32) -> (i32, i32) {
    %c0_i32 = arith.constant 0 : i32
    %c0_i32_0 = arith.constant 0 : i32
    return %arg0, %c0_i32 : i32, i32
  }
}

</mosaic_0001>

<llo_original>
// kernel: tpu_custom_call.1
$region0: #{tpu_custom_call.1}
  #allocation0 [shape = 'u32[]', space=smem, size = 0x4, offset = 0x4, fixed_abs, tag = 'smem constant byte address 0x4 - core index']
  #allocation1 [shape = 'u32[72,128]{1,0:T(1,128)}', space=vmem, size = 0x9000, scoped, tag = 'internal scratch']
  #allocation2 [shape = 'f32[8,100]{1,0:T(8,128)}', space=vmem, size = 0x1000, scoped, tag = 'scratch operand']
  %s0 = inlined_call_operand.vmem [shape: bf16[16,384], index: 0, kind: input, shape index: {}]
  %s1 = inlined_call_operand.vmem [shape: bf16[384,100], index: 1, kind: input, shape index: {}]
  %s2 = inlined_call_operand.vmem [shape: f32[1,100], index: 2, kind: input, shape index: {}]
  %s3 = inlined_call_operand.vmem [shape: f32[100,128], index: 3, kind: input, shape index: {}]
  %s4 = inlined_call_operand.vmem [shape: f32[1,128], index: 4, kind: input, shape index: {}]
  %s5 = inlined_call_operand.hbm [shape: f32[16,128], index: 5, kind: output, shape index: {}]
  %s6 = sld [smem:[#allocation0]]
  $region61: #{tpu_custom_call.1} parent=0
    _
  %s8 = ssub.s32 1, %s6
  %s9 = scalar_select 0, %s8, %s6
  $region1: #{tpu_custom_call.1} parent=0
    #allocation3 [shape = 'u8[8192]{0}', space=vmem, size = 0x2000, scoped, tag = 'output window, operand 0']
    #allocation4 [shape = 's32[2]{0}', space=sflag, size = 0x8, scoped, tag = 'scoped memory for tpu_custom_call.1']
    %10 = vsyncpa [#allocation4], 0
    %s11 = scalar_lea.sflag [#allocation4], 1
    %12 = vsyncpa %s11, 0
    loop: start=0, step=1, limit=8
    $region2: #{tpu_custom_call.1} parent=1 // loop_pre_header
      _
    $region3: #{tpu_custom_call.1} parent=1 // loop_header
      %s14 = sphi 0, %s18
      %p15 = scmp.ge.s32.totalorder %s14, 8
      %s21 = sphi 0, %s33
      %s22 = sphi 0, %s29
      %s23 = sphi 0, %s21
      %s24 = sphi 0, %s22
      %s25 = sphi 0, %s23
      %s26 = sphi 0, %s24
      %s38 = sphi 0, %s40
      %s41 = sphi 0, %s38
      %s42 = sphi 0, %s41
      %s58 = sphi 0, %s42
      %s64 = sphi 0, %s66
      %s67 = sphi 0, %s64
      %s68 = sphi 0, %s67
      %s84 = sphi 0, %s68
      %s88 = sphi 0, %s88
      %s90 = sphi 0, %s88
      %s91 = sphi 0, %s90
      %s105 = sphi 0, %s91
      %s109 = sphi 0, %s109
      %s111 = sphi 0, %s109
      %s112 = sphi 0, %s111
      %s126 = sphi 0, %s112
      %s130 = sphi 0, %s130
      %s132 = sphi 0, %s130
      %s133 = sphi 0, %s132
      %s147 = sphi 0, %s133
      %s153 = sphi 0, %s155
      %s156 = sphi 0, %s153
      %s157 = sphi 0, %s156
      %s173 = sphi 0, %s157
    $region4: #{tpu_custom_call.1} parent=1 // loop_header_branch
      %17 = sbr.rel (%p15) target = $region8
    $region5: #{tpu_custom_call.1} parent=1 // loop_body
      %s19 = ssub.s32 %s14, 1
      %s20 = ssub.s32 %s14, 2
      %s27 = sadd.s32 1, %s22
      %p28 = scmp.ge.s32.totalorder %s27, 3
      %s29 = scalar_select %p28, 0, %s27
      %s30 = sadd.s32 1, %s21
      %s31 = scalar_select %p28, %s30, %s21
      %p32 = scmp.ge.s32.totalorder %s31, 2
      %s33 = scalar_select %p32, 0, %s31
      %s34 = ssub.s32 %s21, %s33
      %s35 = ssub.s32 %s22, %s29
      %s36 = sor.u32 %s34, %s35
      %p37 = scmp.eq.s32.totalorder %s36, 0
      %s39 = sadd.s32 %s38, 1
      %s40 = scalar_select %p37, %s38, %s39
      %p43 = pneg %p37
      %p44 = scmp.eq.s32.totalorder %s14, 5
      %p45 = por %p43, %p44
      %p46 = scmp.ne.s32.totalorder %s38, %s41
      %p47 = scmp.eq.s32.totalorder %s14, 0
      %p48 = por %p46, %p47
      %p49 = scmp.ne.s32.totalorder %s38, %s41
      %p50 = scmp.eq.s32.totalorder %s19, 5
      %p51 = por %p49, %p50
      %p52 = scmp.ne.s32.totalorder %s41, %s42
      %p53 = scmp.eq.s32.totalorder %s19, 0
      %p54 = por %p52, %p53
      %p55 = scmp.ne.s32.totalorder %s41, %s42
      %p56 = scmp.eq.s32.totalorder %s20, 5
      %p57 = por %p55, %p56
      %p59 = scmp.ne.s32.totalorder %s42, %s58
      %p60 = scmp.eq.s32.totalorder %s20, 0
      %p61 = por %p59, %p60
      %s62 = ssub.s32 %s22, %s29
      %p63 = scmp.eq.s32.totalorder %s62, 0
      %s65 = sadd.s32 %s64, 1
      %s66 = scalar_select %p63, %s64, %s65
      %p69 = pneg %p63
      %p70 = scmp.eq.s32.totalorder %s14, 5
      %p71 = por %p69, %p70
      %p72 = scmp.ne.s32.totalorder %s64, %s67
      %p73 = scmp.eq.s32.totalorder %s14, 0
      %p74 = por %p72, %p73
      %p75 = scmp.ne.s32.totalorder %s64, %s67
      %p76 = scmp.eq.s32.totalorder %s19, 5
      %p77 = por %p75, %p76
      %p78 = scmp.ne.s32.totalorder %s67, %s68
      %p79 = scmp.eq.s32.totalorder %s19, 0
      %p80 = por %p78, %p79
      %p81 = scmp.ne.s32.totalorder %s67, %s68
      %p82 = scmp.eq.s32.totalorder %s20, 5
      %p83 = por %p81, %p82
      %p85 = scmp.ne.s32.totalorder %s68, %s84
      %p86 = scmp.eq.s32.totalorder %s20, 0
      %p87 = por %p85, %p86
      %s89 = sadd.s32 %s88, 1
      %p92 = scmp.eq.s32.totalorder %s14, 5
      %p93 = scmp.ne.s32.totalorder %s88, %s90
      %p94 = scmp.eq.s32.totalorder %s14, 0
      %p95 = por %p93, %p94
      %p96 = scmp.ne.s32.totalorder %s88, %s90
      %p97 = scmp.eq.s32.totalorder %s19, 5
      %p98 = por %p96, %p97
      %p99 = scmp.ne.s32.totalorder %s90, %s91
      %p100 = scmp.eq.s32.totalorder %s19, 0
      %p101 = por %p99, %p100
      %p102 = scmp.ne.s32.totalorder %s90, %s91
      %p103 = scmp.eq.s32.totalorder %s20, 5
      %p104 = por %p102, %p103
      %p106 = scmp.ne.s32.totalorder %s91, %s105
      %p107 = scmp.eq.s32.totalorder %s20, 0
      %p108 = por %p106, %p107
      %s110 = sadd.s32 %s109, 1
      %p113 = scmp.eq.s32.totalorder %s14, 5
      %p114 = scmp.ne.s32.totalorder %s109, %s111
      %p115 = scmp.eq.s32.totalorder %s14, 0
      %p116 = por %p114, %p115
      %p117 = scmp.ne.s32.totalorder %s109, %s111
      %p118 = scmp.eq.s32.totalorder %s19, 5
      %p119 = por %p117, %p118
      %p120 = scmp.ne.s32.totalorder %s111, %s112
      %p121 = scmp.eq.s32.totalorder %s19, 0
      %p122 = por %p120, %p121
      %p123 = scmp.ne.s32.totalorder %s111, %s112
      %p124 = scmp.eq.s32.totalorder %s20, 5
      %p125 = por %p123, %p124
      %p127 = scmp.ne.s32.totalorder %s112, %s126
      %p128 = scmp.eq.s32.totalorder %s20, 0
      %p129 = por %p127, %p128
      %s131 = sadd.s32 %s130, 1
      %p134 = scmp.eq.s32.totalorder %s14, 5
      %p135 = scmp.ne.s32.totalorder %s130, %s132
      %p136 = scmp.eq.s32.totalorder %s14, 0
      %p137 = por %p135, %p136
      %p138 = scmp.ne.s32.totalorder %s130, %s132
      %p139 = scmp.eq.s32.totalorder %s19, 5
      %p140 = por %p138, %p139
      %p141 = scmp.ne.s32.totalorder %s132, %s133
      %p142 = scmp.eq.s32.totalorder %s19, 0
      %p143 = por %p141, %p142
      %p144 = scmp.ne.s32.totalorder %s132, %s133
      %p145 = scmp.eq.s32.totalorder %s20, 5
      %p146 = por %p144, %p145
      %p148 = scmp.ne.s32.totalorder %s133, %s147
      %p149 = scmp.eq.s32.totalorder %s20, 0
      %p150 = por %p148, %p149
      %s151 = ssub.s32 %s21, %s33
      %p152 = scmp.eq.s32.totalorder %s151, 0
      %s154 = sadd.s32 %s153, 1
      %s155 = scalar_select %p152, %s153, %s154
      %p158 = pneg %p152
      %p159 = scmp.eq.s32.totalorder %s14, 5
      %p160 = por %p158, %p159
      %p161 = scmp.ne.s32.totalorder %s153, %s156
      %p162 = scmp.eq.s32.totalorder %s14, 0
      %p163 = por %p161, %p162
      %p164 = scmp.ne.s32.totalorder %s153, %s156
      %p165 = scmp.eq.s32.totalorder %s19, 5
      %p166 = por %p164, %p165
      %p167 = scmp.ne.s32.totalorder %s156, %s157
      %p168 = scmp.eq.s32.totalorder %s19, 0
      %p169 = por %p167, %p168
      %p170 = scmp.ne.s32.totalorder %s156, %s157
      %p171 = scmp.eq.s32.totalorder %s20, 5
      %p172 = por %p170, %p171
      %p174 = scmp.ne.s32.totalorder %s157, %s173
      %p175 = scmp.eq.s32.totalorder %s20, 0
      %p176 = por %p174, %p175
      %p177 = scmp.le.s32.totalorder 1, %s14
      %p178 = scmp.lt.s32.totalorder %s14, 7
      %p179 = pnand %p177, %p178
      %p180 = pneg %p179
      // Predicated region
      $region9: #{tpu_custom_call.1} parent=5 // pred_check
        _
      $region10: #{tpu_custom_call.1} parent=5 // pred_check_branch
        %182 = sbr.rel (%p179) target = $region12
      $region11: #{tpu_custom_call.1} parent=5 // pred_region
        %s183 = ssub.s32 %s14, 1
        // Predicated region
        $region13: #{tpu_custom_call.1} parent=11 // pred_check
          %p184 = pneg %p101
        $region14: #{tpu_custom_call.1} parent=11 // pred_check_branch
          %186 = sbr.rel (%p184) target = $region16
        $region15: #{tpu_custom_call.1} parent=11 // pred_region
          _
        $region16: #{tpu_custom_call.1} parent=11 // pred_fallthru
          _
        // Predicated region
        $region17: #{tpu_custom_call.1} parent=11 // pred_check
          %p187 = pneg %p122
        $region18: #{tpu_custom_call.1} parent=11 // pred_check_branch
          %189 = sbr.rel (%p187) target = $region20
        $region19: #{tpu_custom_call.1} parent=11 // pred_region
          _
        $region20: #{tpu_custom_call.1} parent=11 // pred_fallthru
          _
        // Predicated region
        $region21: #{tpu_custom_call.1} parent=11 // pred_check
          %p190 = pneg %p143
        $region22: #{tpu_custom_call.1} parent=11 // pred_check_branch
          %192 = sbr.rel (%p190) target = $region24
        $region23: #{tpu_custom_call.1} parent=11 // pred_region
          _
        $region24: #{tpu_custom_call.1} parent=11 // pred_fallthru
          _
      $region12: #{tpu_custom_call.1} parent=5 // pred_fallthru
        _
      %p193 = scmp.lt.s32.totalorder %s14, 6
      // Predicated region
      $region25: #{tpu_custom_call.1} parent=5 // pred_check
        %p194 = pneg %p193
      $region26: #{tpu_custom_call.1} parent=5 // pred_check_branch
        %196 = sbr.rel (%p194) target = $region28
      $region27: #{tpu_custom_call.1} parent=5 // pred_region
        // Predicated region
        $region29: #{tpu_custom_call.1} parent=27 // pred_check
          %p197 = pneg %p48
        $region30: #{tpu_custom_call.1} parent=27 // pred_check_branch
          %199 = sbr.rel (%p197) target = $region32
        $region31: #{tpu_custom_call.1} parent=27 // pred_region
          %p200 = scmp.lt.s32.totalorder %s21, 1
          %s201 = scalar_select %p200, %s21, 1
          %p202 = scmp.lt.s32.totalorder %s22, 2
          %s203 = scalar_select %p202, %s22, 2
          %s204 = smul.addr %s201, 3
          %s205 = sadd.s32 %s203, %s204
          %s206 = smul.addr %s205, 4
          %s207 = scalar_lea.vmem %s0, %s206
        $region32: #{tpu_custom_call.1} parent=27 // pred_fallthru
          _
        // Predicated region
        $region33: #{tpu_custom_call.1} parent=27 // pred_check
          %p208 = pneg %p74
        $region34: #{tpu_custom_call.1} parent=27 // pred_check_branch
          %210 = sbr.rel (%p208) target = $region36
        $region35: #{tpu_custom_call.1} parent=27 // pred_region
          %s211 = smul.u32 16, %s22
          %p212 = scmp.lt.s32.totalorder %s211, 47
          %s213 = scalar_select %p212, %s211, 47
          %s214 = smul.addr %s213, 4
          %s215 = scalar_lea.vmem %s1, %s214
          %s216 = smul.u32 16, %s22
        $region36: #{tpu_custom_call.1} parent=27 // pred_fallthru
          _
      $region28: #{tpu_custom_call.1} parent=5 // pred_fallthru
        _
      %p217 = scmp.le.s32.totalorder 1, %s14
      %p218 = scmp.lt.s32.totalorder %s14, 7
      %p219 = pnand %p217, %p218
      %p220 = pneg %p219
      // Predicated region
      $region37: #{tpu_custom_call.1} parent=5 // pred_check
        _
      $region38: #{tpu_custom_call.1} parent=5 // pred_check_branch
        %222 = sbr.rel (%p219) target = $region40
      $region39: #{tpu_custom_call.1} parent=5 // pred_region
        %s223 = ssub.s32 %s14, 1
        %p224 = scmp.lt.s32.totalorder %s23, 1
        %s225 = scalar_select %p224, %s23, 1
        %p226 = scmp.lt.s32.totalorder %s24, 2
        %s227 = scalar_select %p226, %s24, 2
        %s228 = smul.addr %s225, 3
        %s229 = sadd.s32 %s227, %s228
        %s230 = smul.addr %s229, 4
        %s231 = scalar_lea.vmem %s0, %s230
        %p232 = pneg %p54
        %p233 = pneg %p51
        %s234 = smul.u32 16, %s24
        %p235 = scmp.lt.s32.totalorder %s234, 47
        %s236 = scalar_select %p235, %s234, 47
        %s237 = smul.addr %s236, 4
        %s238 = scalar_lea.vmem %s1, %s237
        %p239 = pneg %p80
        %p240 = pneg %p77
        %p241 = pneg %p101
        %p242 = pneg %p98
        %p243 = pneg %p122
        %p244 = pneg %p119
        %p245 = pneg %p143
        %p246 = pneg %p140
        %p247 = pneg %p169
        %p248 = pneg %p166
        %s249 = sand.u32 %s156, 1
        %s250 = scalar_lea.sflag [#allocation4], %s249
        %s251 = sand.u32 %s156, 1
        %s252 = smul.addr %s251, 8
        %s253 = scalar_lea.vmem [#allocation3], %s252
        %p254 = scmp.lt.s32.totalorder %s23, 1
        %s255 = scalar_select %p254, %s23, 1
        %p256 = scmp.lt.s32.totalorder %s24, 2
        %s257 = scalar_select %p256, %s24, 2
        %s258 = smul.addr %s255, 3
        %s259 = sadd.s32 %s257, %s258
        %s260 = smul.addr %s259, 4
        %s261 = scalar_lea.vmem %s0, %s260
        %s262 = smul.u32 16, %s24
        %p263 = scmp.lt.s32.totalorder %s262, 47
        %s264 = scalar_select %p263, %s262, 47
        %s265 = smul.addr %s264, 4
        %s266 = scalar_lea.vmem %s1, %s265
        %s267 = smul.u32 16, %s24
        %p268 = scmp.eq.s32.totalorder %s24, 0
        // Predicated region
        $region41: #{tpu_custom_call.1} parent=39 // pred_check
          %p269 = pneg %p268
        $region42: #{tpu_custom_call.1} parent=39 // pred_check_branch
          %271 = sbr.rel (%p269) target = $region44
        $region43: #{tpu_custom_call.1} parent=39 // pred_region
          %vm272 = vcmask 818176
          %273 = vst.msk [vmem:[#allocation2] sm:$0xff] %vm272, 0.0
        $region44: #{tpu_custom_call.1} parent=39 // pred_fallthru
          _
        %v274 = vld [vmem:[#allocation2] sm:$0xff]
        %v275 = vld [vmem:[%s261] sm:$0xf]
        %v276 = vld [vmem:[%s266] sm:$0xf]
        %v277 = vld [vmem:[%s266 + $0x4] sm:$0xf]
        %v278 = vld [vmem:[%s266 + $0x8] sm:$0xf]
        %v279 = vld [vmem:[%s266 + $0xc] sm:$0xf]
        %v280 = vld [vmem:[%s266 + $0x10] sm:$0xf]
        %v281 = vld [vmem:[%s266 + $0x14] sm:$0xf]
        %v282 = vld [vmem:[%s266 + $0x18] sm:$0xf]
        %v283 = vld [vmem:[%s266 + $0x1c] sm:$0xf]
        %v284 = vld [vmem:[%s266 + $0x20] sm:$0xf]
        %v285 = vld [vmem:[%s266 + $0x24] sm:$0xf]
        %v286 = vld [vmem:[%s266 + $0x28] sm:$0xf]
        %v287 = vld [vmem:[%s266 + $0x2c] sm:$0xf]
        %v288 = vld [vmem:[%s266 + $0x30] sm:$0xf]
        %v289 = vld [vmem:[%s266 + $0x34] sm:$0xf]
        %v290 = vld [vmem:[%s266 + $0x38] sm:$0xf]
        %v291 = vld [vmem:[%s266 + $0x3c] sm:$0xf]
        %v308 = vunpack.c.l.b16 %v276
        %v309 = vunpack.c.l.b16 %v277
        %v310 = vunpack.c.l.b16 %v278
        %v311 = vunpack.c.l.b16 %v279
        %v312 = vunpack.c.l.b16 %v280
        %v313 = vunpack.c.l.b16 %v281
        %v314 = vunpack.c.l.b16 %v282
        %v315 = vunpack.c.l.b16 %v283
        %v316 = vunpack.c.l.b16 %v284
        %v317 = vunpack.c.l.b16 %v285
        %v318 = vunpack.c.l.b16 %v286
        %v319 = vunpack.c.l.b16 %v287
        %v320 = vunpack.c.l.b16 %v288
        %v321 = vunpack.c.l.b16 %v289
        %v322 = vunpack.c.l.b16 %v290
        %v323 = vunpack.c.l.b16 %v291
        %v324 = vpack.c.b16 %v309, %v308
        %v325 = vpack.c.b16 %v311, %v310
        %v326 = vpack.c.b16 %v313, %v312
        %v327 = vpack.c.b16 %v315, %v314
        %v328 = vpack.c.b16 %v317, %v316
        %v329 = vpack.c.b16 %v319, %v318
        %v330 = vpack.c.b16 %v321, %v320
        %v331 = vpack.c.b16 %v323, %v322
        %340 = vmatpush.bf16.msra.mxu0 %v331
        %341 = vmatpush.bf16.msra.mxu0 %v330
        %342 = vmatpush.bf16.msra.mxu0 %v329
        %343 = vmatpush.bf16.msra.mxu0 %v328
        %344 = vmatpush.bf16.msra.mxu0 %v327
        %345 = vmatpush.bf16.msra.mxu0 %v326
        %346 = vmatpush.bf16.msra.mxu0 %v325
        %347 = vmatpush.bf16.msra.mxu0 %v324
        %348 = vmatmul.bf16.gmra.mxu0 %v275
        %v349 = vpop.f32.mrf.mxu0
        %v350 = vadd.f32 0.0, %v349
        %v351 = vpop.f32.mrf.mxu0
        %352 = vdwg.mxu0
        %v353 = vadd.f32 %v274, %v350
        %vm354 = vcmask 818176
        %355 = vst.msk [vmem:[#allocation2] sm:$0xff] %vm354, %v353
        %p356 = scmp.eq.s32.totalorder %s24, 2
        // Predicated region
        $region45: #{tpu_custom_call.1} parent=39 // pred_check
          %p357 = pneg %p356
        $region46: #{tpu_custom_call.1} parent=39 // pred_check_branch
          %359 = sbr.rel (%p357) target = $region48
        $region47: #{tpu_custom_call.1} parent=39 // pred_region
          %v360 = vld [vmem:[#allocation2] sm:$0xff]
          %v361 = vld [vmem:[%s2] sm:$0x1]
          %v363 = vperm.slane %v361, 0
          %v365 = vadd.f32 %v360, %v363
          %v366 = vmax.f32 %v365, 0.0
          %v367 = vld [vmem:[%s3] sm:$0xff]
          %v368 = vld [vmem:[%s3 + $0x8] sm:$0xff]
          %v369 = vld [vmem:[%s3 + $0x10] sm:$0xff]
          %v370 = vld [vmem:[%s3 + $0x18] sm:$0xff]
          %v371 = vld [vmem:[%s3 + $0x20] sm:$0xff]
          %v372 = vld [vmem:[%s3 + $0x28] sm:$0xff]
          %v373 = vld [vmem:[%s3 + $0x30] sm:$0xff]
          %v374 = vld [vmem:[%s3 + $0x38] sm:$0xff]
          %v375 = vld [vmem:[%s3 + $0x40] sm:$0xff]
          %v376 = vld [vmem:[%s3 + $0x48] sm:$0xff]
          %v377 = vld [vmem:[%s3 + $0x50] sm:$0xff]
          %v378 = vld [vmem:[%s3 + $0x58] sm:$0xff]
          %v379 = vld [vmem:[%s3 + $0x60] sm:$0xf]
          %v380 = vld [vmem:[%s4] sm:$0x1]
          %v382 = vperm.slane %v380, 0
          %v385 = vsel %vm354, %v366, 0
          %vm387 = vcmask 1043456
          %v389 = vsel %vm387, %v379, 0
          %391 = vmatpush.msra.mxu0 0.0
          %392 = vmatpush.msra.mxu0 0.0
          %393 = vmatpush.msra.mxu0 0.0
          %394 = vmatpush.msra.mxu0 %v389
          %395 = vmatpush.msra.mxu0 %v378
          %396 = vmatpush.msra.mxu0 %v377
          %397 = vmatpush.msra.mxu0 %v376
          %398 = vmatpush.msra.mxu0 %v375
          %399 = vmatpush.msra.mxu0 %v374
          %400 = vmatpush.msra.mxu0 %v373
          %401 = vmatpush.msra.mxu0 %v372
          %402 = vmatpush.msra.mxu0 %v371
          %403 = vmatpush.msra.mxu0 %v370
          %404 = vmatpush.msra.mxu0 %v369
          %405 = vmatpush.msra.mxu0 %v368
          %406 = vmatpush.msra.mxu0 %v367
          %407 = vmatmul.f32.gmra.mxu0 %v385
          %v408 = vpop.f32.mrf.mxu0
          %v409 = vadd.f32 %v382, %v408
          %410 = vdwg.mxu0
          %411 = vmax.xlane.f32.xlu0 %v409
          %v412 = vpop.xlane.xlu0 %411
          %v413 = vsub.f32 %v409, %v412
          %v414 = vmul.f32 %v413, 1.442695
          %v415 = vpow.pop %v414
          %416 = vadd.xlane.f32.xlu0 %v415
          %v417 = vpop.xlane.xlu0 %416
          %v418 = vrcp.pop %v417
          %v419 = vmul.f32 %v417, %v418
          %v420 = vsub.f32 1.0, %v419
          %v421 = vmul.f32 %v418, %v420
          %v422 = vadd.f32 %v418, %v421
          %vm423 = vweird.f32 %v417
          %vm424 = vweird.f32 %v418
          %vm425 = vmor %vm423, %vm424
          %v426 = vsel %vm425, %v418, %v422
          %v427 = vand.u32 2147483647, %v417
          %vm428 = vcmp.eq.f32.partialorder %v427, 8.507059e+37
          %v429 = vand.u32 %v417, 2147483648
          %v430 = vor.u32 1.1754944e-38, %v429
          %v431 = vsel %vm428, %v430, %v426
          %v432 = vmul.f32 %v415, %v431
          %433 = vst [vmem:[%s253] sm:$0xff] %v432
        $region48: #{tpu_custom_call.1} parent=39 // pred_fallthru
          _
        %s434 = sand.u32 %s156, 1
        %s435 = scalar_lea.sflag [#allocation4], %s434
        %s436 = sand.u32 %s156, 1
        %s437 = smul.addr %s436, 8
        %s438 = scalar_lea.vmem [#allocation3], %s437
        // Predicated region
        $region49: #{tpu_custom_call.1} parent=39 // pred_check
          %p439 = pneg %p166
        $region50: #{tpu_custom_call.1} parent=39 // pred_check_branch
          %441 = sbr.rel (%p439) target = $region52
        $region51: #{tpu_custom_call.1} parent=39 // pred_region
          %443 = vsyncadd %s435, 0
          %s444 = smul.addr %s23, 8
          %s445 = scalar_lea.hbm %s5, %s444
          %s447 = sshll.u32 %s438, 4
          %s448 = int_to_ptr.vmem [resolvable:$true] %s447
          %s449 = sshll.u32 %s445, 4
          %s450 = int_to_ptr.hbm [resolvable:$true] %s449
          %452 = dma.vmem_to_hbm [thread:$0]  %s448, 128, %s450, %s435
        $region52: #{tpu_custom_call.1} parent=39 // pred_fallthru
          _
      $region40: #{tpu_custom_call.1} parent=5 // pred_fallthru
        _
      %p453 = scmp.le.s32.totalorder 2, %s14
      // Predicated region
      $region53: #{tpu_custom_call.1} parent=5 // pred_check
        %p454 = pneg %p453
      $region54: #{tpu_custom_call.1} parent=5 // pred_check_branch
        %456 = sbr.rel (%p454) target = $region56
      $region55: #{tpu_custom_call.1} parent=5 // pred_region
        %s457 = ssub.s32 %s14, 2
        // Predicated region
        $region57: #{tpu_custom_call.1} parent=55 // pred_check
          %p458 = pneg %p172
        $region58: #{tpu_custom_call.1} parent=55 // pred_check_branch
          %460 = sbr.rel (%p458) target = $region60
        $region59: #{tpu_custom_call.1} parent=55 // pred_region
          %s461 = sand.u32 %s157, 1
          %s462 = scalar_lea.sflag [#allocation4], %s461
          %s463 = sand.u32 %s157, 1
          %s464 = smul.addr %s463, 8
          %s465 = scalar_lea.vmem [#allocation3], %s464
          %467 = dma.done %s462, 128
        $region60: #{tpu_custom_call.1} parent=55 // pred_fallthru
          _
      $region56: #{tpu_custom_call.1} parent=5 // pred_fallthru
        _
    $region6: #{tpu_custom_call.1} parent=1 // loop_footer
      %s18 = sadd.s32 1, %s14
    $region7: #{tpu_custom_call.1} parent=1 // loop_footer_branch
      %13 = sbr.rel target = $region3
    $region8: #{tpu_custom_call.1} parent=1 // loop_exit
      _
    %468 = vsyncpa [#allocation4], 1
    %s469 = scalar_lea.sflag [#allocation4], 1
    %470 = vsyncpa %s469, 1

</llo_original>
